<compile_context>
chip_gen: v7x
topology: tpu7x:2x2x1
jax: 0.10.0
libtpu: 0.0.40
codegen_flags: <defaults>
</compile_context>

<pallas_src>
import math

import jax
import jax.numpy as jnp
from jax.experimental import pallas as pl
from jax.experimental.pallas import tpu as pltpu


_VMEM_LIMIT_BYTES = 48 * 1024 * 1024       # scoped-VMEM override (safe on v5e/v6e/v7x)
_PAYLOAD_BUDGET_BYTES = 36 * 1024 * 1024   # 2 buffers x (x + out + pe) blocks must fit here
_SPLIT_THRESHOLD_BYTES = 4 * 1024 * 1024   # above this, insist on >= 2 grid steps (megacore)


def _build_pe(d_pe: int, max_len: int = 512) -> jnp.ndarray:
    """Deterministic sinusoidal positional encoding, matching the PyTorch init (fp32)."""
    position = jnp.arange(0, max_len, dtype=jnp.float32)[:, None]             # [max_len, 1]
    div_term = jnp.exp(
        jnp.arange(0, d_pe, 2, dtype=jnp.float32) * (-math.log(10000.0) / d_pe)
    )                                                                          # [ceil(d_pe/2)]
    angles = position * div_term                                               # [max_len, ceil(d_pe/2)]
    pe = jnp.zeros((max_len, d_pe), dtype=jnp.float32)
    pe = pe.at[:, 0::2].set(jnp.sin(angles))
    pe = pe.at[:, 1::2].set(jnp.cos(angles)[:, : (d_pe // 2)])
    return pe                                                                  # [max_len, d_pe]


def _sublane_multiple(dtype) -> int:
    # f32 -> 8, bf16/f16 -> 16, int8/fp8 -> 32 (sub-32-bit dtypes pack sublanes).
    return max(8, 32 // jnp.dtype(dtype).itemsize)


def _choose_sr(S: int, D: int, sub: int) -> int:
    """Pick Sr | S for the (B, Sr, (S//Sr)*D) view.

    Preference order: lane-dense trailing dim (C % 128 == 0), full sublane
    utilisation (Sr >= sublane multiple), long contiguous lane runs, larger C.
    """
    best_sr, best_key = 1, None
    for sr in range(1, S + 1):
        if S % sr != 0:
            continue
        c = (S // sr) * D
        key = (
            1 if c % 128 == 0 else 0,   # unmasked full-lane stores (biggest layout lever)
            min(sr, sub),               # sublane utilisation of the (sublane, lane) tile
            min(c, 1024),               # decent contiguous lane runs
            -sr,                        # tie-break towards larger C
        )
        if best_key is None or key > best_key:
            best_sr, best_key = sr, key
    return best_sr


def _pick_tiles(B: int, Sr: int, C: int, x_dtype, out_dtype, pe_dtype):
    """Choose (tb, tsr, tc) for the (B, Sr, C) view — bounded, (8,128)-legal blocks."""
    ix = jnp.dtype(x_dtype).itemsize
    io = jnp.dtype(out_dtype).itemsize
    ipe = jnp.dtype(pe_dtype).itemsize
    sub = _sublane_multiple(x_dtype)

    # Per-block element budget: 2 pipeline buffers each for the x, out and pe blocks.
    e_max = max(8 * 128, _PAYLOAD_BUDGET_BYTES // (2 * (ix + io + ipe)))

    # --- lane tile ---
    min_tsr = min(Sr, sub)
    avail_c = max(128, e_max // min_tsr)
    if C <= avail_c and (C % 128 == 0 or C <= 128):
        tc = C                                        # full lane dim (always legal)
    else:
        tc = max(128, (min(C, avail_c) // 128) * 128)  # 128-multiple; cdiv masks the edge

    # --- sublane tile ---
    avail_sr = max(1, e_max // tc)
    if Sr <= avail_sr:
        tsr = Sr                                      # full dim (legal even if < sub)
    else:
        tsr = max(sub, (avail_sr // sub) * sub)       # multiple of sub; cdiv masks the edge

    # --- batch tile (leading dim: no alignment constraint) ---
    tb = min(B, max(1, e_max // (tc * tsr)))

    # --- megacore: guarantee >= 2 grid steps for non-trivial inputs ---
    def n_steps(tb_, tsr_, tc_):
        return pl.cdiv(B, tb_) * pl.cdiv(Sr, tsr_) * pl.cdiv(C, tc_)

    total_bytes = B * Sr * C * ix
    if total_bytes >= _SPLIT_THRESHOLD_BYTES:
        for _ in range(4):
            if n_steps(tb, tsr, tc) >= 2:
                break
            if tb >= 2:
                tb = (tb + 1) // 2
            elif tc % 256 == 0:
                tc //= 2
            elif tc > 256:
                tc = max(128, ((tc // 2) // 128) * 128)
            elif tsr % (2 * sub) == 0:
                tsr //= 2
            else:
                break

    return tb, tsr, tc


def _time_encoder_kernel(x_ref, pe_ref, o_ref):
    # x_ref / o_ref: (tb, tsr, tc); pe_ref: (tsr, tc) — broadcast over the batch dim.
    # Add in the output (promoted) dtype to match PyTorch buffer-promotion semantics.
    o_ref[...] = x_ref[...].astype(o_ref.dtype) + pe_ref[...].astype(o_ref.dtype)


def time_encoder(x: jnp.ndarray, pe: jnp.ndarray, *, donate_x: bool = False) -> jnp.ndarray:
    """x: [B, S, D], pe: [max_len, d_pe] (fp32 buffer) -> x + pe[None, :S, :]."""
    B, S, D = x.shape
    max_len, d_pe = pe.shape
    if S > max_len:
        raise ValueError(f"seq_len {S} exceeds positional-encoding max_len {max_len}")
    if D != d_pe:
        raise ValueError(f"feature_dim {D} != d_pe {d_pe}")

    out_dtype = jnp.promote_types(x.dtype, pe.dtype)   # PyTorch-style promotion (f32 buffer)
    sub = _sublane_multiple(x.dtype)

    Sr = _choose_sr(S, D, sub)
    C = (S // Sr) * D

    # Contiguous reshapes: free (metadata-only) under jit.
    x3 = x.reshape(B, Sr, C)
    pe3 = pe[:S, :].reshape(Sr, C)                     # stays in its own dtype; cast is in-kernel

    tb, tsr, tc = _pick_tiles(B, Sr, C, x.dtype, out_dtype, pe.dtype)
    # Batch axis last (fastest): pe's block index is batch-invariant, so the pe
    # tile stays VMEM-resident across the inner loop (no repeated pe HBM traffic).
    grid = (pl.cdiv(C, tc), pl.cdiv(Sr, tsr), pl.cdiv(B, tb))

    # Optional in-place residual-style add (caller must no longer need x).
    aliases = {0: 0} if (donate_x and out_dtype == x.dtype) else {}

    out3 = pl.pallas_call(
        _time_encoder_kernel,
        out_shape=jax.ShapeDtypeStruct((B, Sr, C), out_dtype),
        grid_spec=pltpu.PrefetchScalarGridSpec(
            num_scalar_prefetch=0,
            grid=grid,
            in_specs=[
                pl.BlockSpec((tb, tsr, tc), lambda c, s, b: (b, s, c)),   # x
                pl.BlockSpec((tsr, tc), lambda c, s, b: (s, c)),          # pe (batch-invariant)
            ],
            out_specs=pl.BlockSpec((tb, tsr, tc), lambda c, s, b: (b, s, c)),
        ),
        compiler_params=pltpu.CompilerParams(
            dimension_semantics=("parallel", "parallel", "parallel"),
            vmem_limit_bytes=_VMEM_LIMIT_BYTES,
        ),
        input_output_aliases=aliases,
    )(x3, pe3)

    return out3.reshape(B, S, D)


if __name__ == "__main__":
    MAX_LEN = 512
    enc = jax.jit(lambda x, pe: time_encoder(x, pe))

    # Small shapes consistent with the module: batch=2, seq=8, feature_dim=d_pe=32.
    B, S, D = 2, 8, 32
    key = jax.random.PRNGKey(0)
    k0, k1 = jax.random.split(key)

    x = jax.random.normal(k0, (B, S, D), dtype=jnp.float32)
    pe = _build_pe(d_pe=D, max_len=MAX_LEN)

    out = jax.block_until_ready(enc(x, pe))
    ref = x + pe[None, :S, :]
    assert out.shape == (B, S, D)
    assert out.dtype == ref.dtype
    assert jnp.allclose(out, ref, atol=1e-6), "mismatch vs reference"

    # Second small shape exercising a different Sr / multi-sublane path: B=8, S=16, D=64.
    B2, S2, D2 = 8, 16, 64
    xb = jax.random.normal(k1, (B2, S2, D2), dtype=jnp.float32)
    peb = _build_pe(d_pe=D2, max_len=MAX_LEN)
    outb = jax.block_until_ready(enc(xb, peb))
    refb = xb + peb[None, :S2, :]
    assert jnp.allclose(outb, refb, atol=1e-6), "mismatch vs reference (tiled path)"

    print("KERNEL_OK")
</pallas_src>

<mosaic_0001>
module attributes {stable_mosaic.version = 11 : i64} {
  func.func @_time_encoder_kernel(%arg0: i32, %arg1: i32, %arg2: i32, %arg3: memref<2x2x128xf32, #tpu.memory_space<vmem>>, %arg4: memref<2x128xf32, #tpu.memory_space<vmem>>, %arg5: memref<2x2x128xf32, #tpu.memory_space<vmem>>) attributes {dimension_semantics = [#tpu.dimension_semantics<parallel>, #tpu.dimension_semantics<parallel>, #tpu.dimension_semantics<parallel>], iteration_bounds = array<i64: 1, 1, 1>, scalar_prefetch = 0 : i64, scratch_operands = 0 : i64, tpu.core_type = #tpu.core_type<tc>, window_params = [{transform_indices = @transform_0, window_bounds = array<i64: 2, 2, 128>}, {transform_indices = @transform_1, window_bounds = array<i64: 2, 128>}, {transform_indices = @transform_2, window_bounds = array<i64: 2, 2, 128>}]} {
    %c0 = arith.constant 0 : index
    %c0_0 = arith.constant 0 : index
    %c0_1 = arith.constant 0 : index
    %0 = vector.load %arg3[%c0, %c0_0, %c0_1] : memref<2x2x128xf32, #tpu.memory_space<vmem>>, vector<2x2x128xf32>
    %c0_2 = arith.constant 0 : index
    %c0_3 = arith.constant 0 : index
    %1 = vector.load %arg4[%c0_2, %c0_3] : memref<2x128xf32, #tpu.memory_space<vmem>>, vector<2x128xf32>
    %2 = vector.shape_cast %1 : vector<2x128xf32> to vector<1x2x128xf32>
    %3 = vector.broadcast %2 : vector<1x2x128xf32> to vector<2x2x128xf32>
    %4 = arith.addf %0, %3 : vector<2x2x128xf32>
    %c0_4 = arith.constant 0 : index
    %c0_5 = arith.constant 0 : index
    %c0_6 = arith.constant 0 : index
    %5 = vector.load %arg5[%c0_4, %c0_5, %c0_6] : memref<2x2x128xf32, #tpu.memory_space<vmem>>, vector<2x2x128xf32>
    tpu.vector_store %arg5[%c0_4, %c0_5, %c0_6], %4 {strides = array<i32>} : memref<2x2x128xf32, #tpu.memory_space<vmem>>, vector<2x2x128xf32>,
    return
  }
  func.func @transform_0(%arg0: i32, %arg1: i32, %arg2: i32) -> (i32, i32, i32) {
    %c0_i32 = arith.constant 0 : i32
    return %arg2, %arg1, %arg0 : i32, i32, i32
  }
  func.func @transform_1(%arg0: i32, %arg1: i32, %arg2: i32) -> (i32, i32) {
    %c0_i32 = arith.constant 0 : i32
    return %arg1, %arg0 : i32, i32
  }
  func.func @transform_2(%arg0: i32, %arg1: i32, %arg2: i32) -> (i32, i32, i32) {
    %c0_i32 = arith.constant 0 : i32
    return %arg2, %arg1, %arg0 : i32, i32, i32
  }
}

</mosaic_0001>

<llo_original>
// kernel: _lambda_.1
$region0: #{_lambda_.1}
  #allocation0 [shape = 'u32[]', space=smem, size = 0x4, offset = 0x4, fixed_abs, tag = 'smem constant byte address 0x4 - core index']
  #allocation1 [shape = 'u32[144,128]{1,0:T(1,128)}', space=vmem, size = 0x12000, scoped, tag = 'internal scratch']
  %s0 = inlined_call_operand.vmem [shape: f32[2,2,128], index: 0, kind: input, shape index: {}]
  %s1 = inlined_call_operand.vmem [shape: f32[2,128], index: 1, kind: input, shape index: {}]
  %s2 = inlined_call_operand.vmem [shape: f32[2,2,128], index: 2, kind: output, shape index: {}]
  %s3 = sld [smem:[#allocation0]]
  $region18: #{_lambda_.1} parent=0
    _
  %s5 = ssub.s32 1, %s3
  %s6 = scalar_select 0, %s5, %s3
  // Predicated region
  $region2: #{_lambda_.1} parent=0 // pred_check
    _
  $region3: #{_lambda_.1} parent=0 // pred_check_branch
    %8 = sbr.rel (0) target = $region5
  $region4: #{_lambda_.1} parent=0 // pred_region
    _
  $region5: #{_lambda_.1} parent=0 // pred_fallthru
    _
  // Predicated region
  $region6: #{_lambda_.1} parent=0 // pred_check
    _
  $region7: #{_lambda_.1} parent=0 // pred_check_branch
    %10 = sbr.rel (0) target = $region9
  $region8: #{_lambda_.1} parent=0 // pred_region
    _
  $region9: #{_lambda_.1} parent=0 // pred_fallthru
    _
  %v11 = vld [vmem:[%s0] sm:$0x3]
  %v12 = vld [vmem:[%s0 + $0x2] sm:$0x3]
  %v13 = vld [vmem:[%s1] sm:$0x3]
  %v14 = vadd.f32 %v11, %v13
  %v15 = vadd.f32 %v12, %v13
  %16 = vst [vmem:[%s2] sm:$0x3] %v14
  %17 = vst [vmem:[%s2 + $0x2] sm:$0x3] %v15
  // Predicated region
  $region10: #{_lambda_.1} parent=0 // pred_check
    _
  $region11: #{_lambda_.1} parent=0 // pred_check_branch
    %19 = sbr.rel (0) target = $region13
  $region12: #{_lambda_.1} parent=0 // pred_region
    _
  $region13: #{_lambda_.1} parent=0 // pred_fallthru
    _
  // Predicated region
  $region14: #{_lambda_.1} parent=0 // pred_check
    _
  $region15: #{_lambda_.1} parent=0 // pred_check_branch
    %21 = sbr.rel (0) target = $region17
  $region16: #{_lambda_.1} parent=0 // pred_region
    _
  $region17: #{_lambda_.1} parent=0 // pred_fallthru
    _

</llo_original>
